<compile_context>
chip_gen: v7x
topology: tpu7x:2x2x1
jax: 0.10.0
libtpu: 0.0.40
codegen_flags: <defaults>
</compile_context>

<pallas_src>
import jax
import jax.numpy as jnp
from jax.experimental import pallas as pl
from jax.experimental.pallas import tpu as pltpu

OUT_PAD = 128  # lane-dense padded width for the 2-wide output head


def bert_head_kernel(p_ref, x_ref, w1_ref, b1_ref, w2_ref, b2_ref, o_ref,
                     acc_ref):
    s = pl.program_id(1)

    @pl.when(s == 0)
    def _():
        acc_ref[...] = jnp.zeros_like(acc_ref)

    # MXU pooling: block-diagonal ones (tb, tb*ts) @ (tb*ts, H) -> (tb, H),
    # accumulated in f32.  The streamed tile is never upcast/materialized in
    # f32 and there is no cross-sublane XLU reduce.
    tb, ts, H = x_ref.shape
    x2d = x_ref[...].reshape(tb * ts, H)
    acc_ref[...] += jnp.dot(p_ref[...], x2d,
                            preferred_element_type=jnp.float32)

    @pl.when(s == pl.num_programs(1) - 1)
    def _():
        # 1/S is folded into w1 by the wrapper, so the accumulator (sequence
        # sum) feeds the head directly; bf16 feed, f32 accumulation.
        pooled = acc_ref[...].astype(w1_ref.dtype)          # (tb, H)

        # Linear(H, 256) + bias
        h = jnp.dot(pooled, w1_ref[...],
                    preferred_element_type=jnp.float32) + b1_ref[...]
        # LeakyReLU (PyTorch default negative_slope = 0.01)
        h = jnp.where(h > 0, h, 0.01 * h)

        # Linear(256, 2) + bias, computed into a lane-dense padded (tb, 128)
        # block (columns >= 2 are zero-padded and dropped by the wrapper).
        out = jnp.dot(h, w2_ref[...],
                      preferred_element_type=jnp.float32) + b2_ref[...]
        o_ref[...] = out.astype(o_ref.dtype)


def _auto_seq_tile(S, tb, H, itemsize, x_budget_bytes):
    """Largest divisor of S whose double-buffered x block fits the budget.

    Prefers ts == S (single pooling step per batch tile); otherwise keeps ts a
    multiple of 16 (bf16 sublane packing; 8 suffices for f32) when possible.
    """
    def fits(ts):
        return 2 * tb * ts * H * itemsize <= x_budget_bytes

    if fits(S):
        return S
    for ts in range(S - 1, 0, -1):
        if S % ts == 0 and ts % 16 == 0 and fits(ts):
            return ts
    for ts in range(S - 1, 0, -1):
        if S % ts == 0 and ts % 8 == 0 and fits(ts):
            return ts
    raise ValueError("could not find a valid sequence tile for S=%d" % S)


def bert_regression_head(last_hidden_state, w1, b1, w2, b2, *, tb=8, ts=None,
                         x_vmem_budget_bytes=24 << 20, vmem_limit_bytes=None):
    """last_hidden_state: [B, S, H] (bf16 preferred, f32 accepted) -> [B, 2] f32.

    Pass last_hidden_state in bf16 (cast at the encoder output): the kernel is
    HBM-bound and an f32 stream doubles the dominant read.
    """
    B, S, H = last_hidden_state.shape
    assert w1.shape == (H, 256) and b1.shape == (256,)
    assert w2.shape == (256, 2) and b2.shape == (2,)

    itemsize = jnp.dtype(last_hidden_state.dtype).itemsize
    if ts is None:
        ts = _auto_seq_tile(S, tb, H, itemsize, x_vmem_budget_bytes)
    assert B % tb == 0 and S % ts == 0

    x_dtype = last_hidden_state.dtype
    # Block-diagonal pooling matrix: P[b, b*ts + t] = 1 (exact in bf16).
    P = (jnp.arange(tb)[:, None]
         == (jnp.arange(tb * ts) // ts)[None, :]).astype(x_dtype)

    # Fold 1/S into w1 (exact f32 scale), keep w1 resident in bf16.
    w1s = (w1.astype(jnp.float32) / float(S)).astype(jnp.bfloat16)
    b1r = b1.reshape(1, 256).astype(jnp.float32)

    # Pad the 2-wide output projection to lane width 128 (zeros elsewhere) so
    # the kernel's output store is a full-lane, unmasked store.
    w2p = jnp.zeros((256, OUT_PAD), jnp.float32).at[:, :2].set(
        w2.astype(jnp.float32))
    b2p = jnp.zeros((1, OUT_PAD), jnp.float32).at[:, :2].set(
        b2.reshape(1, 2).astype(jnp.float32))

    grid = (B // tb, S // ts)

    # Note: the constant-index_map operands (P, w1, b1, w2, b2) are fetched
    # once and stay resident; their double-buffer cost is < 2 MiB with bf16 w1,
    # well inside the VMEM headroom left by the x-block budget.
    out_padded = pl.pallas_call(
        bert_head_kernel,
        out_shape=jax.ShapeDtypeStruct((B, OUT_PAD), jnp.float32),
        grid_spec=pltpu.PrefetchScalarGridSpec(
            num_scalar_prefetch=0,
            grid=grid,
            in_specs=[
                # Pooling matrix: constant block index -> resident.
                pl.BlockSpec((tb, tb * ts), lambda i, s: (0, 0)),
                # x streams per (batch-tile, seq-tile), double-buffered.
                pl.BlockSpec((tb, ts, H), lambda i, s: (i, s, 0)),
                # Head weights/biases: resident.
                pl.BlockSpec((H, 256), lambda i, s: (0, 0)),
                pl.BlockSpec((1, 256), lambda i, s: (0, 0)),
                pl.BlockSpec((256, OUT_PAD), lambda i, s: (0, 0)),
                pl.BlockSpec((1, OUT_PAD), lambda i, s: (0, 0)),
            ],
            out_specs=pl.BlockSpec((tb, OUT_PAD), lambda i, s: (i, 0)),
            scratch_shapes=[pltpu.VMEM((tb, H), jnp.float32)],
        ),
        compiler_params=pltpu.CompilerParams(
            dimension_semantics=("parallel", "arbitrary"),
            vmem_limit_bytes=vmem_limit_bytes),
    )(P, last_hidden_state, w1s, b1r, w2p, b2p)

    return out_padded[:, :2]


def reference_head(last_hidden_state, w1, b1, w2, b2):
    pooled = jnp.mean(last_hidden_state.astype(jnp.float32), axis=1)
    h = pooled @ w1 + b1
    h = jnp.where(h > 0, h, 0.01 * h)
    return h @ w2 + b2


if __name__ == "__main__":
    # Small shapes consistent with the module: max_length=64 sequence,
    # reduced hidden_dim=128 (stands in for 768), batch=8 (full sublane tile).
    B, S, H = 8, 64, 128

    key = jax.random.PRNGKey(0)
    k_x, k_w1, k_b1, k_w2, k_b2 = jax.random.split(key, 5)

    # Synthetic "last_hidden_state" from the (external) BERT encoder, handed to
    # the kernel in bf16 per the input contract (memory-bound stream).
    x = jax.random.normal(k_x, (B, S, H), dtype=jnp.float32).astype(jnp.bfloat16)

    # Deterministic MLP parameters (shapes from nn.Linear(H,256), nn.Linear(256,2)).
    w1 = jax.random.normal(k_w1, (H, 256), dtype=jnp.float32) * (1.0 / jnp.sqrt(H))
    b1 = jax.random.normal(k_b1, (256,), dtype=jnp.float32) * 0.01
    w2 = jax.random.normal(k_w2, (256, 2), dtype=jnp.float32) * (1.0 / jnp.sqrt(256.0))
    b2 = jax.random.normal(k_b2, (2,), dtype=jnp.float32) * 0.01

    logits = bert_regression_head(x, w1, b1, w2, b2, tb=8)
    logits = jax.block_until_ready(logits)

    ref = reference_head(x, w1, b1, w2, b2)
    assert logits.shape == (B, 2)
    # Residual vs the pure-f32 reference comes only from bf16 residency of w1
    # and the bf16 feed of the pooled activations to the MXU (sums and matmuls
    # accumulate in f32) -> ~1e-3-scale; 1e-2 tolerance is comfortable.
    assert jnp.allclose(logits, ref, atol=1e-2, rtol=1e-2), "mismatch vs reference"

    print("KERNEL_OK")
</pallas_src>

<mosaic_0001>
module attributes {stable_mosaic.version = 11 : i64} {
  func.func @bert_head_kernel(%arg0: i32, %arg1: i32, %arg2: memref<8x512xbf16, #tpu.memory_space<vmem>>, %arg3: memref<8x64x128xbf16, #tpu.memory_space<vmem>>, %arg4: memref<128x256xbf16, #tpu.memory_space<vmem>>, %arg5: memref<1x256xf32, #tpu.memory_space<vmem>>, %arg6: memref<256x128xf32, #tpu.memory_space<vmem>>, %arg7: memref<1x128xf32, #tpu.memory_space<vmem>>, %arg8: memref<8x128xf32, #tpu.memory_space<vmem>>, %arg9: memref<8x128xf32, #tpu.memory_space<vmem>>) attributes {dimension_semantics = [#tpu.dimension_semantics<parallel>, #tpu.dimension_semantics<arbitrary>], iteration_bounds = array<i64: 1, 1>, scalar_prefetch = 0 : i64, scratch_operands = 1 : i64, tpu.core_type = #tpu.core_type<tc>, window_params = [{pipeline_mode = #tpu.pipeline_mode<synchronous>, transform_indices = @transform_0, window_bounds = array<i64: 8, 512>}, {transform_indices = @transform_1, window_bounds = array<i64: 8, 64, 128>}, {pipeline_mode = #tpu.pipeline_mode<synchronous>, transform_indices = @transform_2, window_bounds = array<i64: 128, 256>}, {pipeline_mode = #tpu.pipeline_mode<synchronous>, transform_indices = @transform_3, window_bounds = array<i64: 1, 256>}, {pipeline_mode = #tpu.pipeline_mode<synchronous>, transform_indices = @transform_4, window_bounds = array<i64: 256, 128>}, {pipeline_mode = #tpu.pipeline_mode<synchronous>, transform_indices = @transform_5, window_bounds = array<i64: 1, 128>}, {transform_indices = @transform_6, window_bounds = array<i64: 8, 128>}]} {
    %c0_i32 = arith.constant 0 : i32
    %0 = arith.cmpi eq, %arg1, %c0_i32 : i32
    %1 = arith.extui %0 : i1 to i32
    %c0_i32_0 = arith.constant 0 : i32
    %2 = arith.cmpi ne, %1, %c0_i32_0 : i32
    scf.if %2 {
      %cst_11 = arith.constant 0.000000e+00 : f32
      %13 = vector.broadcast %cst_11 : f32 to vector<8x128xf32>
      %c0_12 = arith.constant 0 : index
      %c0_13 = arith.constant 0 : index
      %14 = vector.load %arg9[%c0_12, %c0_13] : memref<8x128xf32, #tpu.memory_space<vmem>>, vector<8x128xf32>
      tpu.vector_store %arg9[%c0_12, %c0_13], %13 {strides = array<i32>} : memref<8x128xf32, #tpu.memory_space<vmem>>, vector<8x128xf32>,
    } else {
    }
    %c0 = arith.constant 0 : index
    %c0_1 = arith.constant 0 : index
    %c0_2 = arith.constant 0 : index
    %3 = vector.load %arg3[%c0, %c0_1, %c0_2] : memref<8x64x128xbf16, #tpu.memory_space<vmem>>, vector<8x64x128xbf16>
    %4 = vector.shape_cast %3 : vector<8x64x128xbf16> to vector<512x128xbf16>
    %c0_3 = arith.constant 0 : index
    %c0_4 = arith.constant 0 : index
    %5 = vector.load %arg9[%c0_3, %c0_4] : memref<8x128xf32, #tpu.memory_space<vmem>>, vector<8x128xf32>
    %c0_5 = arith.constant 0 : index
    %c0_6 = arith.constant 0 : index
    %6 = vector.load %arg2[%c0_5, %c0_6] : memref<8x512xbf16, #tpu.memory_space<vmem>>, vector<8x512xbf16>
    %cst = arith.constant dense<0.000000e+00> : vector<8x128xf32>
    %7 = tpu.matmul %6, %4, %cst {dimension_numbers = #tpu.dot_dimension_numbers<[1], [0], [0], [1], [0, 0, 1, 1], [], []>} : vector<8x512xbf16>, vector<512x128xbf16>, vector<8x128xf32> -> vector<8x128xf32>
    %8 = arith.addf %5, %7 : vector<8x128xf32>
    %c0_7 = arith.constant 0 : index
    %c0_8 = arith.constant 0 : index
    %9 = vector.load %arg9[%c0_7, %c0_8] : memref<8x128xf32, #tpu.memory_space<vmem>>, vector<8x128xf32>
    tpu.vector_store %arg9[%c0_7, %c0_8], %8 {strides = array<i32>} : memref<8x128xf32, #tpu.memory_space<vmem>>, vector<8x128xf32>,
    %c0_i32_9 = arith.constant 0 : i32
    %10 = arith.cmpi eq, %arg1, %c0_i32_9 : i32
    %11 = arith.extui %10 : i1 to i32
    %c0_i32_10 = arith.constant 0 : i32
    %12 = arith.cmpi ne, %11, %c0_i32_10 : i32
    scf.if %12 {
      %c0_11 = arith.constant 0 : index
      %c0_12 = arith.constant 0 : index
      %13 = vector.load %arg9[%c0_11, %c0_12] : memref<8x128xf32, #tpu.memory_space<vmem>>, vector<8x128xf32>
      %14 = arith.truncf %13 : vector<8x128xf32> to vector<8x128xbf16>
      %c0_13 = arith.constant 0 : index
      %c0_14 = arith.constant 0 : index
      %15 = vector.load %arg4[%c0_13, %c0_14] : memref<128x256xbf16, #tpu.memory_space<vmem>>, vector<128x256xbf16>
      %cst_15 = arith.constant dense<0.000000e+00> : vector<8x256xf32>
      %16 = tpu.matmul %14, %15, %cst_15 {dimension_numbers = #tpu.dot_dimension_numbers<[1], [0], [0], [1], [0, 0, 1, 1], [], []>} : vector<8x128xbf16>, vector<128x256xbf16>, vector<8x256xf32> -> vector<8x256xf32>
      %c0_16 = arith.constant 0 : index
      %c0_17 = arith.constant 0 : index
      %17 = vector.load %arg5[%c0_16, %c0_17] : memref<1x256xf32, #tpu.memory_space<vmem>>, vector<1x256xf32>
      %18 = vector.broadcast %17 : vector<1x256xf32> to vector<8x256xf32>
      %19 = arith.addf %16, %18 : vector<8x256xf32>
      %cst_18 = arith.constant 0.000000e+00 : f32
      %20 = vector.broadcast %cst_18 : f32 to vector<8x256xf32>
      %21 = arith.cmpf ogt, %19, %20 : vector<8x256xf32>
      %cst_19 = arith.constant 0.00999999977 : f32
      %22 = vector.broadcast %cst_19 : f32 to vector<8x256xf32>
      %23 = arith.mulf %22, %19 : vector<8x256xf32>
      %24 = arith.select %21, %19, %23 : vector<8x256xi1>, vector<8x256xf32>
      %c0_20 = arith.constant 0 : index
      %c0_21 = arith.constant 0 : index
      %25 = vector.load %arg6[%c0_20, %c0_21] : memref<256x128xf32, #tpu.memory_space<vmem>>, vector<256x128xf32>
      %cst_22 = arith.constant dense<0.000000e+00> : vector<8x128xf32>
      %26 = tpu.matmul %24, %25, %cst_22 {dimension_numbers = #tpu.dot_dimension_numbers<[1], [0], [0], [1], [0, 0, 1, 1], [], []>} : vector<8x256xf32>, vector<256x128xf32>, vector<8x128xf32> -> vector<8x128xf32>
      %c0_23 = arith.constant 0 : index
      %c0_24 = arith.constant 0 : index
      %27 = vector.load %arg7[%c0_23, %c0_24] : memref<1x128xf32, #tpu.memory_space<vmem>>, vector<1x128xf32>
      %28 = vector.broadcast %27 : vector<1x128xf32> to vector<8x128xf32>
      %29 = arith.addf %26, %28 : vector<8x128xf32>
      %c0_25 = arith.constant 0 : index
      %c0_26 = arith.constant 0 : index
      %30 = vector.load %arg8[%c0_25, %c0_26] : memref<8x128xf32, #tpu.memory_space<vmem>>, vector<8x128xf32>
      tpu.vector_store %arg8[%c0_25, %c0_26], %29 {strides = array<i32>} : memref<8x128xf32, #tpu.memory_space<vmem>>, vector<8x128xf32>,
    } else {
    }
    return
  }
  func.func @transform_0(%arg0: i32, %arg1: i32) -> (i32, i32) {
    %c0_i32 = arith.constant 0 : i32
    %c0_i32_0 = arith.constant 0 : i32
    %c0_i32_1 = arith.constant 0 : i32
    return %c0_i32, %c0_i32_0 : i32, i32
  }
  func.func @transform_1(%arg0: i32, %arg1: i32) -> (i32, i32, i32) {
    %c0_i32 = arith.constant 0 : i32
    %c0_i32_0 = arith.constant 0 : i32
    return %arg0, %arg1, %c0_i32 : i32, i32, i32
  }
  func.func @transform_2(%arg0: i32, %arg1: i32) -> (i32, i32) {
    %c0_i32 = arith.constant 0 : i32
    %c0_i32_0 = arith.constant 0 : i32
    %c0_i32_1 = arith.constant 0 : i32
    return %c0_i32, %c0_i32_0 : i32, i32
  }
  func.func @transform_3(%arg0: i32, %arg1: i32) -> (i32, i32) {
    %c0_i32 = arith.constant 0 : i32
    %c0_i32_0 = arith.constant 0 : i32
    %c0_i32_1 = arith.constant 0 : i32
    return %c0_i32, %c0_i32_0 : i32, i32
  }
  func.func @transform_4(%arg0: i32, %arg1: i32) -> (i32, i32) {
    %c0_i32 = arith.constant 0 : i32
    %c0_i32_0 = arith.constant 0 : i32
    %c0_i32_1 = arith.constant 0 : i32
    return %c0_i32, %c0_i32_0 : i32, i32
  }
  func.func @transform_5(%arg0: i32, %arg1: i32) -> (i32, i32) {
    %c0_i32 = arith.constant 0 : i32
    %c0_i32_0 = arith.constant 0 : i32
    %c0_i32_1 = arith.constant 0 : i32
    return %c0_i32, %c0_i32_0 : i32, i32
  }
  func.func @transform_6(%arg0: i32, %arg1: i32) -> (i32, i32) {
    %c0_i32 = arith.constant 0 : i32
    %c0_i32_0 = arith.constant 0 : i32
    return %arg0, %c0_i32 : i32, i32
  }
}

</mosaic_0001>

<llo_original>
// kernel: tpu_custom_call.1
$region0: #{tpu_custom_call.1}
  #allocation0 [shape = 'u32[]', space=smem, size = 0x4, offset = 0x4, fixed_abs, tag = 'smem constant byte address 0x4 - core index']
  #allocation1 [shape = 'u32[144,128]{1,0:T(1,128)}', space=vmem, size = 0x12000, scoped, tag = 'internal scratch']
  #allocation2 [shape = 'f32[8,128]{1,0:T(8,128)}', space=vmem, size = 0x1000, scoped, tag = 'scratch operand']
  %s0 = inlined_call_operand.hbm [shape: bf16[8,512], index: 0, kind: input, shape index: {}]
  %s1 = inlined_call_operand.hbm [shape: bf16[8,64,128], index: 1, kind: input, shape index: {}]
  %s2 = inlined_call_operand.hbm [shape: bf16[128,256], index: 2, kind: input, shape index: {}]
  %s3 = inlined_call_operand.vmem [shape: f32[1,256], index: 3, kind: input, shape index: {}]
  %s4 = inlined_call_operand.hbm [shape: f32[256,128], index: 4, kind: input, shape index: {}]
  %s5 = inlined_call_operand.vmem [shape: f32[1,128], index: 5, kind: input, shape index: {}]
  %s6 = inlined_call_operand.hbm [shape: f32[8,128], index: 6, kind: output, shape index: {}]
  %s7 = sld [smem:[#allocation0]]
  $region58: #{tpu_custom_call.1} parent=0
    _
  %s9 = ssub.s32 1, %s7
  %s10 = scalar_select 0, %s9, %s7
  $region1: #{tpu_custom_call.1} parent=0
    #allocation3 [shape = 'u8[8192]{0}', space=vmem, size = 0x2000, scoped, tag = 'input window, operand 0, single buffered']
    #allocation4 [shape = 's32[1]{0}', space=sflag, size = 0x4, scoped, tag = 'scoped memory for tpu_custom_call.1']
    #allocation5 [shape = 's32[1]{0}', space=sflag, size = 0x4, scoped, tag = 'scoped memory for tpu_custom_call.1']
    #allocation6 [shape = 'u8[131072]{0}', space=vmem, size = 0x20000, scoped, tag = 'input window, operand 1, single buffered']
    #allocation7 [shape = 's32[1]{0}', space=sflag, size = 0x4, scoped, tag = 'scoped memory for tpu_custom_call.1']
    #allocation8 [shape = 'u8[65536]{0}', space=vmem, size = 0x10000, scoped, tag = 'input window, operand 2, single buffered']
    #allocation9 [shape = 'u8[131072]{0}', space=vmem, size = 0x20000, scoped, tag = 'input window, operand 4, single buffered']
    #allocation10 [shape = 's32[1]{0}', space=sflag, size = 0x4, scoped, tag = 'scoped memory for tpu_custom_call.1']
    #allocation11 [shape = 'u8[4096]{0}', space=vmem, size = 0x1000, scoped, tag = 'output window, operand 0, single buffered']
    %11 = vsyncpa [#allocation4], 0
    %12 = vsyncpa [#allocation7], 0
    %13 = vsyncpa [#allocation10], 0
    %14 = vsyncpa [#allocation5], 0
    // Predicated region
    $region2: #{tpu_custom_call.1} parent=1 // pred_check
      _
    $region3: #{tpu_custom_call.1} parent=1 // pred_check_branch
      %16 = sbr.rel (0) target = $region5
    $region4: #{tpu_custom_call.1} parent=1 // pred_region
      %s18 = ssub.s32 256, 256
      %19 = vsyncadd [#allocation4], %s18
      %s21 = sshll.u32 [#allocation3], 4
      %s22 = int_to_ptr.vmem [resolvable:$true] %s21
      %24 = dma.hbm_to_vmem [thread:$0]  %s0, 256, %s22, [#allocation4]
    $region5: #{tpu_custom_call.1} parent=1 // pred_fallthru
      _
    // Predicated region
    $region6: #{tpu_custom_call.1} parent=1 // pred_check
      _
    $region7: #{tpu_custom_call.1} parent=1 // pred_check_branch
      %26 = sbr.rel (0) target = $region9
    $region8: #{tpu_custom_call.1} parent=1 // pred_region
      %s28 = ssub.s32 4096, 4096
      %29 = vsyncadd [#allocation7], %s28
      %s30 = sshll.u32 [#allocation6], 4
      %s31 = int_to_ptr.vmem [resolvable:$true] %s30
      %36 = dma.hbm_to_vmem [thread:$0]  %s1, 4096, %s31, [#allocation7], 64, 64, 4
    $region9: #{tpu_custom_call.1} parent=1 // pred_fallthru
      _
    // Predicated region
    $region10: #{tpu_custom_call.1} parent=1 // pred_check
      _
    $region11: #{tpu_custom_call.1} parent=1 // pred_check_branch
      %38 = sbr.rel (0) target = $region13
    $region12: #{tpu_custom_call.1} parent=1 // pred_region
      %s40 = ssub.s32 2048, 2048
      %41 = vsyncadd [#allocation7], %s40
      %s42 = sshll.u32 [#allocation8], 4
      %s43 = int_to_ptr.vmem [resolvable:$true] %s42
      %48 = dma.hbm_to_vmem [thread:$0]  %s2, 2048, %s43, [#allocation7], 128, 128, 8
    $region13: #{tpu_custom_call.1} parent=1 // pred_fallthru
      _
    // Predicated region
    $region14: #{tpu_custom_call.1} parent=1 // pred_check
      _
    $region15: #{tpu_custom_call.1} parent=1 // pred_check_branch
      %50 = sbr.rel (0) target = $region17
    $region16: #{tpu_custom_call.1} parent=1 // pred_region
      _
    $region17: #{tpu_custom_call.1} parent=1 // pred_fallthru
      _
    // Predicated region
    $region18: #{tpu_custom_call.1} parent=1 // pred_check
      _
    $region19: #{tpu_custom_call.1} parent=1 // pred_check_branch
      %52 = sbr.rel (0) target = $region21
    $region20: #{tpu_custom_call.1} parent=1 // pred_region
      %s54 = ssub.s32 4096, 4096
      %55 = vsyncadd [#allocation10], %s54
      %s56 = sshll.u32 [#allocation9], 4
      %s57 = int_to_ptr.vmem [resolvable:$true] %s56
      %62 = dma.hbm_to_vmem [thread:$0]  %s4, 4096, %s57, [#allocation10], 128, 128, 8
    $region21: #{tpu_custom_call.1} parent=1 // pred_fallthru
      _
    // Predicated region
    $region22: #{tpu_custom_call.1} parent=1 // pred_check
      _
    $region23: #{tpu_custom_call.1} parent=1 // pred_check_branch
      %64 = sbr.rel (0) target = $region25
    $region24: #{tpu_custom_call.1} parent=1 // pred_region
      _
    $region25: #{tpu_custom_call.1} parent=1 // pred_fallthru
      _
    // Predicated region
    $region26: #{tpu_custom_call.1} parent=1 // pred_check
      _
    $region27: #{tpu_custom_call.1} parent=1 // pred_check_branch
      %66 = sbr.rel (0) target = $region29
    $region28: #{tpu_custom_call.1} parent=1 // pred_region
      %67 = dma.done [#allocation4], 256
    $region29: #{tpu_custom_call.1} parent=1 // pred_fallthru
      _
    // Predicated region
    $region30: #{tpu_custom_call.1} parent=1 // pred_check
      _
    $region31: #{tpu_custom_call.1} parent=1 // pred_check_branch
      %69 = sbr.rel (0) target = $region33
    $region32: #{tpu_custom_call.1} parent=1 // pred_region
      %70 = dma.done [#allocation7], 4096
    $region33: #{tpu_custom_call.1} parent=1 // pred_fallthru
      _
    // Predicated region
    $region34: #{tpu_custom_call.1} parent=1 // pred_check
      _
    $region35: #{tpu_custom_call.1} parent=1 // pred_check_branch
      %72 = sbr.rel (0) target = $region37
    $region36: #{tpu_custom_call.1} parent=1 // pred_region
      %73 = dma.done [#allocation7], 2048
    $region37: #{tpu_custom_call.1} parent=1 // pred_fallthru
      _
    // Predicated region
    $region38: #{tpu_custom_call.1} parent=1 // pred_check
      _
    $region39: #{tpu_custom_call.1} parent=1 // pred_check_branch
      %75 = sbr.rel (0) target = $region41
    $region40: #{tpu_custom_call.1} parent=1 // pred_region
      %76 = dma.done [#allocation10], 4096
    $region41: #{tpu_custom_call.1} parent=1 // pred_fallthru
      _
    %p78 = scmp.eq.s32.totalorder 0, 0
    // Predicated region
    $region42: #{tpu_custom_call.1} parent=1 // pred_check
      %p79 = pneg %p78
    $region43: #{tpu_custom_call.1} parent=1 // pred_check_branch
      %81 = sbr.rel (%p79) target = $region45
    $region44: #{tpu_custom_call.1} parent=1 // pred_region
      %82 = vst [vmem:[#allocation2] sm:$0xff] 0.0
    $region45: #{tpu_custom_call.1} parent=1 // pred_fallthru
      _
    %v83 = vld [vmem:[#allocation6] sm:$0xf]
    %v84 = vld [vmem:[#allocation6 + $0x4] sm:$0xf]
    %v85 = vld [vmem:[#allocation6 + $0x8] sm:$0xf]
    %v86 = vld [vmem:[#allocation6 + $0xc] sm:$0xf]
    %v87 = vld [vmem:[#allocation6 + $0x10] sm:$0xf]
    %v88 = vld [vmem:[#allocation6 + $0x14] sm:$0xf]
    %v89 = vld [vmem:[#allocation6 + $0x18] sm:$0xf]
    %v90 = vld [vmem:[#allocation6 + $0x1c] sm:$0xf]
    %v91 = vld [vmem:[#allocation6 + $0x20] sm:$0xf]
    %v92 = vld [vmem:[#allocation6 + $0x24] sm:$0xf]
    %v93 = vld [vmem:[#allocation6 + $0x28] sm:$0xf]
    %v94 = vld [vmem:[#allocation6 + $0x2c] sm:$0xf]
    %v95 = vld [vmem:[#allocation6 + $0x30] sm:$0xf]
    %v96 = vld [vmem:[#allocation6 + $0x34] sm:$0xf]
    %v97 = vld [vmem:[#allocation6 + $0x38] sm:$0xf]
    %v98 = vld [vmem:[#allocation6 + $0x3c] sm:$0xf]
    %v99 = vld [vmem:[#allocation6 + $0x40] sm:$0xf]
    %v100 = vld [vmem:[#allocation6 + $0x44] sm:$0xf]
    %v101 = vld [vmem:[#allocation6 + $0x48] sm:$0xf]
    %v102 = vld [vmem:[#allocation6 + $0x4c] sm:$0xf]
    %v103 = vld [vmem:[#allocation6 + $0x50] sm:$0xf]
    %v104 = vld [vmem:[#allocation6 + $0x54] sm:$0xf]
    %v105 = vld [vmem:[#allocation6 + $0x58] sm:$0xf]
    %v106 = vld [vmem:[#allocation6 + $0x5c] sm:$0xf]
    %v107 = vld [vmem:[#allocation6 + $0x60] sm:$0xf]
    %v108 = vld [vmem:[#allocation6 + $0x64] sm:$0xf]
    %v109 = vld [vmem:[#allocation6 + $0x68] sm:$0xf]
    %v110 = vld [vmem:[#allocation6 + $0x6c] sm:$0xf]
    %v111 = vld [vmem:[#allocation6 + $0x70] sm:$0xf]
    %v112 = vld [vmem:[#allocation6 + $0x74] sm:$0xf]
    %v113 = vld [vmem:[#allocation6 + $0x78] sm:$0xf]
    %v114 = vld [vmem:[#allocation6 + $0x7c] sm:$0xf]
    %v115 = vld [vmem:[#allocation6 + $0x80] sm:$0xf]
    %v116 = vld [vmem:[#allocation6 + $0x84] sm:$0xf]
    %v117 = vld [vmem:[#allocation6 + $0x88] sm:$0xf]
    %v118 = vld [vmem:[#allocation6 + $0x8c] sm:$0xf]
    %v119 = vld [vmem:[#allocation6 + $0x90] sm:$0xf]
    %v120 = vld [vmem:[#allocation6 + $0x94] sm:$0xf]
    %v121 = vld [vmem:[#allocation6 + $0x98] sm:$0xf]
    %v122 = vld [vmem:[#allocation6 + $0x9c] sm:$0xf]
    %v123 = vld [vmem:[#allocation6 + $0xa0] sm:$0xf]
    %v124 = vld [vmem:[#allocation6 + $0xa4] sm:$0xf]
    %v125 = vld [vmem:[#allocation6 + $0xa8] sm:$0xf]
    %v126 = vld [vmem:[#allocation6 + $0xac] sm:$0xf]
    %v127 = vld [vmem:[#allocation6 + $0xb0] sm:$0xf]
    %v128 = vld [vmem:[#allocation6 + $0xb4] sm:$0xf]
    %v129 = vld [vmem:[#allocation6 + $0xb8] sm:$0xf]
    %v130 = vld [vmem:[#allocation6 + $0xbc] sm:$0xf]
    %v131 = vld [vmem:[#allocation6 + $0xc0] sm:$0xf]
    %v132 = vld [vmem:[#allocation6 + $0xc4] sm:$0xf]
    %v133 = vld [vmem:[#allocation6 + $0xc8] sm:$0xf]
    %v134 = vld [vmem:[#allocation6 + $0xcc] sm:$0xf]
    %v135 = vld [vmem:[#allocation6 + $0xd0] sm:$0xf]
    %v136 = vld [vmem:[#allocation6 + $0xd4] sm:$0xf]
    %v137 = vld [vmem:[#allocation6 + $0xd8] sm:$0xf]
    %v138 = vld [vmem:[#allocation6 + $0xdc] sm:$0xf]
    %v139 = vld [vmem:[#allocation6 + $0xe0] sm:$0xf]
    %v140 = vld [vmem:[#allocation6 + $0xe4] sm:$0xf]
    %v141 = vld [vmem:[#allocation6 + $0xe8] sm:$0xf]
    %v142 = vld [vmem:[#allocation6 + $0xec] sm:$0xf]
    %v143 = vld [vmem:[#allocation6 + $0xf0] sm:$0xf]
    %v144 = vld [vmem:[#allocation6 + $0xf4] sm:$0xf]
    %v145 = vld [vmem:[#allocation6 + $0xf8] sm:$0xf]
    %v146 = vld [vmem:[#allocation6 + $0xfc] sm:$0xf]
    %v147 = vld [vmem:[#allocation2] sm:$0xff]
    %v148 = vld [vmem:[#allocation3] sm:$0xff]
    %v149 = vld [vmem:[#allocation3 + $0x8] sm:$0xff]
    %v152 = vunpack.c.l.b16 %v148
    %v153 = vunpack.c.h.b16 %v148
    %v154 = vunpack.c.l.b16 %v149
    %v155 = vunpack.c.h.b16 %v149
    %v156 = vpack.c.b16 %v152, %v152
    %v157 = vpack.c.b16 %v153, %v153
    %v158 = vpack.c.b16 %v154, %v154
    %v159 = vpack.c.b16 %v155, %v155
    %v228 = vunpack.c.l.b16 %v83
    %v229 = vunpack.c.l.b16 %v84
    %v230 = vunpack.c.l.b16 %v85
    %v231 = vunpack.c.l.b16 %v86
    %v232 = vunpack.c.l.b16 %v87
    %v233 = vunpack.c.l.b16 %v88
    %v234 = vunpack.c.l.b16 %v89
    %v235 = vunpack.c.l.b16 %v90
    %v236 = vunpack.c.l.b16 %v91
    %v237 = vunpack.c.l.b16 %v92
    %v238 = vunpack.c.l.b16 %v93
    %v239 = vunpack.c.l.b16 %v94
    %v240 = vunpack.c.l.b16 %v95
    %v241 = vunpack.c.l.b16 %v96
    %v242 = vunpack.c.l.b16 %v97
    %v243 = vunpack.c.l.b16 %v98
    %v244 = vunpack.c.l.b16 %v99
    %v245 = vunpack.c.l.b16 %v100
    %v246 = vunpack.c.l.b16 %v101
    %v247 = vunpack.c.l.b16 %v102
    %v248 = vunpack.c.l.b16 %v103
    %v249 = vunpack.c.l.b16 %v104
    %v250 = vunpack.c.l.b16 %v105
    %v251 = vunpack.c.l.b16 %v106
    %v252 = vunpack.c.l.b16 %v107
    %v253 = vunpack.c.l.b16 %v108
    %v254 = vunpack.c.l.b16 %v109
    %v255 = vunpack.c.l.b16 %v110
    %v256 = vunpack.c.l.b16 %v111
    %v257 = vunpack.c.l.b16 %v112
    %v258 = vunpack.c.l.b16 %v113
    %v259 = vunpack.c.l.b16 %v114
    %v260 = vunpack.c.l.b16 %v115
    %v261 = vunpack.c.l.b16 %v116
    %v262 = vunpack.c.l.b16 %v117
    %v263 = vunpack.c.l.b16 %v118
    %v264 = vunpack.c.l.b16 %v119
    %v265 = vunpack.c.l.b16 %v120
    %v266 = vunpack.c.l.b16 %v121
    %v267 = vunpack.c.l.b16 %v122
    %v268 = vunpack.c.l.b16 %v123
    %v269 = vunpack.c.l.b16 %v124
    %v270 = vunpack.c.l.b16 %v125
    %v271 = vunpack.c.l.b16 %v126
    %v272 = vunpack.c.l.b16 %v127
    %v273 = vunpack.c.l.b16 %v128
    %v274 = vunpack.c.l.b16 %v129
    %v275 = vunpack.c.l.b16 %v130
    %v276 = vunpack.c.l.b16 %v131
    %v277 = vunpack.c.l.b16 %v132
    %v278 = vunpack.c.l.b16 %v133
    %v279 = vunpack.c.l.b16 %v134
    %v280 = vunpack.c.l.b16 %v135
    %v281 = vunpack.c.l.b16 %v136
    %v282 = vunpack.c.l.b16 %v137
    %v283 = vunpack.c.l.b16 %v138
    %v284 = vunpack.c.l.b16 %v139
    %v285 = vunpack.c.l.b16 %v140
    %v286 = vunpack.c.l.b16 %v141
    %v287 = vunpack.c.l.b16 %v142
    %v288 = vunpack.c.l.b16 %v143
    %v289 = vunpack.c.l.b16 %v144
    %v290 = vunpack.c.l.b16 %v145
    %v291 = vunpack.c.l.b16 %v146
    %v292 = vpack.c.b16 %v229, %v228
    %v293 = vpack.c.b16 %v231, %v230
    %v294 = vpack.c.b16 %v233, %v232
    %v295 = vpack.c.b16 %v235, %v234
    %v296 = vpack.c.b16 %v237, %v236
    %v297 = vpack.c.b16 %v239, %v238
    %v298 = vpack.c.b16 %v241, %v240
    %v299 = vpack.c.b16 %v243, %v242
    %v300 = vpack.c.b16 %v245, %v244
    %v301 = vpack.c.b16 %v247, %v246
    %v302 = vpack.c.b16 %v249, %v248
    %v303 = vpack.c.b16 %v251, %v250
    %v304 = vpack.c.b16 %v253, %v252
    %v305 = vpack.c.b16 %v255, %v254
    %v306 = vpack.c.b16 %v257, %v256
    %v307 = vpack.c.b16 %v259, %v258
    %v308 = vpack.c.b16 %v261, %v260
    %v309 = vpack.c.b16 %v263, %v262
    %v310 = vpack.c.b16 %v265, %v264
    %v311 = vpack.c.b16 %v267, %v266
    %v312 = vpack.c.b16 %v269, %v268
    %v313 = vpack.c.b16 %v271, %v270
    %v314 = vpack.c.b16 %v273, %v272
    %v315 = vpack.c.b16 %v275, %v274
    %v316 = vpack.c.b16 %v277, %v276
    %v317 = vpack.c.b16 %v279, %v278
    %v318 = vpack.c.b16 %v281, %v280
    %v319 = vpack.c.b16 %v283, %v282
    %v320 = vpack.c.b16 %v285, %v284
    %v321 = vpack.c.b16 %v287, %v286
    %v322 = vpack.c.b16 %v289, %v288
    %v323 = vpack.c.b16 %v291, %v290
    %356 = vmatprep.subr.bf16.mxu0 0
    %357 = vmatpush1.bf16.msra.mxu0 %v292
    %358 = vmatprep.subr.bf16.mxu0 0
    %359 = vmatpush1.bf16.msra.mxu0 %v293
    %360 = vmatprep.subr.bf16.mxu0 0
    %361 = vmatpush1.bf16.msra.mxu0 %v294
    %362 = vmatprep.subr.bf16.mxu0 0
    %363 = vmatpush1.bf16.msra.mxu0 %v295
    %364 = vmatprep.subr.bf16.mxu0 0
    %365 = vmatpush1.bf16.msra.mxu0 %v296
    %366 = vmatprep.subr.bf16.mxu0 0
    %367 = vmatpush1.bf16.msra.mxu0 %v297
    %368 = vmatprep.subr.bf16.mxu0 0
    %369 = vmatpush1.bf16.msra.mxu0 %v298
    %370 = vmatprep.subr.bf16.mxu0 0
    %371 = vmatpush1.bf16.msra.mxu0 %v299
    %372 = vmatprep.subr.bf16.mxu0 0
    %373 = vmatpush1.bf16.msra.mxu0 %v300
    %374 = vmatprep.subr.bf16.mxu0 0
    %375 = vmatpush1.bf16.msra.mxu0 %v301
    %376 = vmatprep.subr.bf16.mxu0 0
    %377 = vmatpush1.bf16.msra.mxu0 %v302
    %378 = vmatprep.subr.bf16.mxu0 0
    %379 = vmatpush1.bf16.msra.mxu0 %v303
    %380 = vmatprep.subr.bf16.mxu0 0
    %381 = vmatpush1.bf16.msra.mxu0 %v304
    %382 = vmatprep.subr.bf16.mxu0 0
    %383 = vmatpush1.bf16.msra.mxu0 %v305
    %384 = vmatprep.subr.bf16.mxu0 0
    %385 = vmatpush1.bf16.msra.mxu0 %v306
    %386 = vmatprep.subr.bf16.mxu0 0
    %387 = vmatpush1.bf16.msra.mxu0 %v307
    %388 = vmatprep.mubr.bf16.mxu0 %v157
    %389 = vmatmul.mubr.bf16.gmra.mrb[0].mxu0 %v156
    %v390 = vpop.f32.mrb[0].mxu0
    %v391 = vadd.f32 0.0, %v390
    %v392 = vpop.f32.mrb[0].mxu0
    %v393 = vpop.f32.mrb[0].mxu0
    %v394 = vpop.f32.mrb[0].mxu0
    %395 = vdwg.mxu0
    %396 = vmatprep.subr.bf16.mxu0 0
    %397 = vmatpush1.bf16.msra.mxu0 %v308
    %398 = vmatprep.subr.bf16.mxu0 0
    %399 = vmatpush1.bf16.msra.mxu0 %v309
    %400 = vmatprep.subr.bf16.mxu0 0
    %401 = vmatpush1.bf16.msra.mxu0 %v310
    %402 = vmatprep.subr.bf16.mxu0 0
    %403 = vmatpush1.bf16.msra.mxu0 %v311
    %404 = vmatprep.subr.bf16.mxu0 0
    %405 = vmatpush1.bf16.msra.mxu0 %v312
    %406 = vmatprep.subr.bf16.mxu0 0
    %407 = vmatpush1.bf16.msra.mxu0 %v313
    %408 = vmatprep.subr.bf16.mxu0 0
    %409 = vmatpush1.bf16.msra.mxu0 %v314
    %410 = vmatprep.subr.bf16.mxu0 0
    %411 = vmatpush1.bf16.msra.mxu0 %v315
    %412 = vmatprep.subr.bf16.mxu0 0
    %413 = vmatpush1.bf16.msra.mxu0 %v316
    %414 = vmatprep.subr.bf16.mxu0 0
    %415 = vmatpush1.bf16.msra.mxu0 %v317
    %416 = vmatprep.subr.bf16.mxu0 0
    %417 = vmatpush1.bf16.msra.mxu0 %v318
    %418 = vmatprep.subr.bf16.mxu0 0
    %419 = vmatpush1.bf16.msra.mxu0 %v319
    %420 = vmatprep.subr.bf16.mxu0 0
    %421 = vmatpush1.bf16.msra.mxu0 %v320
    %422 = vmatprep.subr.bf16.mxu0 0
    %423 = vmatpush1.bf16.msra.mxu0 %v321
    %424 = vmatprep.subr.bf16.mxu0 0
    %425 = vmatpush1.bf16.msra.mxu0 %v322
    %426 = vmatprep.subr.bf16.mxu0 0
    %427 = vmatpush1.bf16.msra.mxu0 %v323
    %428 = vmatprep.mubr.bf16.mxu0 %v159
    %429 = vmatmul.mubr.bf16.gmra.mrb[0].mxu0 %v158
    %v430 = vpop.f32.mrb[0].mxu0
    %v431 = vadd.f32 %v391, %v430
    %v432 = vpop.f32.mrb[0].mxu0
    %v433 = vpop.f32.mrb[0].mxu0
    %v434 = vpop.f32.mrb[0].mxu0
    %435 = vdwg.mxu0
    %v436 = vadd.f32 %v147, %v431
    %437 = vst [vmem:[#allocation2] sm:$0xff] %v436
    // Predicated region
    $region46: #{tpu_custom_call.1} parent=1 // pred_check
      %p438 = pneg %p78
    $region47: #{tpu_custom_call.1} parent=1 // pred_check_branch
      %440 = sbr.rel (%p438) target = $region49
    $region48: #{tpu_custom_call.1} parent=1 // pred_region
      %v441 = vld [vmem:[#allocation2] sm:$0xff]
      %v442 = vpack.c.bf16 %v441, %v441
      %v443 = vld [vmem:[#allocation8] sm:$0xff]
      %v444 = vld [vmem:[#allocation8 + $0x8] sm:$0xff]
      %v445 = vld [vmem:[#allocation8 + $0x10] sm:$0xff]
      %v446 = vld [vmem:[#allocation8 + $0x18] sm:$0xff]
      %v447 = vld [vmem:[#allocation8 + $0x20] sm:$0xff]
      %v448 = vld [vmem:[#allocation8 + $0x28] sm:$0xff]
      %v449 = vld [vmem:[#allocation8 + $0x30] sm:$0xff]
      %v450 = vld [vmem:[#allocation8 + $0x38] sm:$0xff]
      %v451 = vld [vmem:[#allocation8 + $0x40] sm:$0xff]
      %v452 = vld [vmem:[#allocation8 + $0x48] sm:$0xff]
      %v453 = vld [vmem:[#allocation8 + $0x50] sm:$0xff]
      %v454 = vld [vmem:[#allocation8 + $0x58] sm:$0xff]
      %v455 = vld [vmem:[#allocation8 + $0x60] sm:$0xff]
      %v456 = vld [vmem:[#allocation8 + $0x68] sm:$0xff]
      %v457 = vld [vmem:[#allocation8 + $0x70] sm:$0xff]
      %v458 = vld [vmem:[#allocation8 + $0x78] sm:$0xff]
      %v459 = vld [vmem:[%s3] sm:$0x3]
      %v461 = vlaneseq
      %v462 = vshrl.u32 %v461, 7
      %v463 = vsub.s32 0, %v462
      %v464 = vrot.slane %v459, %v463
      %v465 = vlaneseq
      %v466 = vshrl.u32 %v465, 7
      %v467 = vsub.s32 1, %v466
      %v468 = vrot.slane %v459, %v467
      %v487 = vunpack.c.l.b16 %v443
      %v488 = vunpack.c.h.b16 %v443
      %v489 = vunpack.c.l.b16 %v444
      %v490 = vunpack.c.h.b16 %v444
      %v491 = vunpack.c.l.b16 %v445
      %v492 = vunpack.c.h.b16 %v445
      %v493 = vunpack.c.l.b16 %v446
      %v494 = vunpack.c.h.b16 %v446
      %v495 = vunpack.c.l.b16 %v447
      %v496 = vunpack.c.h.b16 %v447
      %v497 = vunpack.c.l.b16 %v448
      %v498 = vunpack.c.h.b16 %v448
      %v499 = vunpack.c.l.b16 %v449
      %v500 = vunpack.c.h.b16 %v449
      %v501 = vunpack.c.l.b16 %v450
      %v502 = vunpack.c.h.b16 %v450
      %v503 = vunpack.c.l.b16 %v451
      %v504 = vunpack.c.h.b16 %v451
      %v505 = vunpack.c.l.b16 %v452
      %v506 = vunpack.c.h.b16 %v452
      %v507 = vunpack.c.l.b16 %v453
      %v508 = vunpack.c.h.b16 %v453
      %v509 = vunpack.c.l.b16 %v454
      %v510 = vunpack.c.h.b16 %v454
      %v511 = vunpack.c.l.b16 %v455
      %v512 = vunpack.c.h.b16 %v455
      %v513 = vunpack.c.l.b16 %v456
      %v514 = vunpack.c.h.b16 %v456
      %v515 = vunpack.c.l.b16 %v457
      %v516 = vunpack.c.h.b16 %v457
      %v517 = vunpack.c.l.b16 %v458
      %v518 = vunpack.c.h.b16 %v458
      %v519 = vpack.c.b16 %v489, %v487
      %v520 = vpack.c.b16 %v490, %v488
      %v521 = vpack.c.b16 %v493, %v491
      %v522 = vpack.c.b16 %v494, %v492
      %v523 = vpack.c.b16 %v497, %v495
      %v524 = vpack.c.b16 %v498, %v496
      %v525 = vpack.c.b16 %v501, %v499
      %v526 = vpack.c.b16 %v502, %v500
      %v527 = vpack.c.b16 %v505, %v503
      %v528 = vpack.c.b16 %v506, %v504
      %v529 = vpack.c.b16 %v509, %v507
      %v530 = vpack.c.b16 %v510, %v508
      %v531 = vpack.c.b16 %v513, %v511
      %v532 = vpack.c.b16 %v514, %v512
      %v533 = vpack.c.b16 %v517, %v515
      %v534 = vpack.c.b16 %v518, %v516
      %551 = vmatprep.subr.bf16.mxu0 %v520
      %552 = vmatpush1.bf16.msra.mxu0 %v519
      %553 = vmatprep.subr.bf16.mxu0 %v522
      %554 = vmatpush1.bf16.msra.mxu0 %v521
      %555 = vmatprep.subr.bf16.mxu0 %v524
      %556 = vmatpush1.bf16.msra.mxu0 %v523
      %557 = vmatprep.subr.bf16.mxu0 %v526
      %558 = vmatpush1.bf16.msra.mxu0 %v525
      %559 = vmatprep.subr.bf16.mxu0 %v528
      %560 = vmatpush1.bf16.msra.mxu0 %v527
      %561 = vmatprep.subr.bf16.mxu0 %v530
      %562 = vmatpush1.bf16.msra.mxu0 %v529
      %563 = vmatprep.subr.bf16.mxu0 %v532
      %564 = vmatpush1.bf16.msra.mxu0 %v531
      %565 = vmatprep.subr.bf16.mxu0 %v534
      %566 = vmatpush1.bf16.msra.mxu0 %v533
      %567 = vmatprep.subr.bf16.mxu0 0
      %568 = vmatpush1.bf16.msra.mxu0 0
      %569 = vmatprep.subr.bf16.mxu0 0
      %570 = vmatpush1.bf16.msra.mxu0 0
      %571 = vmatprep.subr.bf16.mxu0 0
      %572 = vmatpush1.bf16.msra.mxu0 0
      %573 = vmatprep.subr.bf16.mxu0 0
      %574 = vmatpush1.bf16.msra.mxu0 0
      %575 = vmatprep.subr.bf16.mxu0 0
      %576 = vmatpush1.bf16.msra.mxu0 0
      %577 = vmatprep.subr.bf16.mxu0 0
      %578 = vmatpush1.bf16.msra.mxu0 0
      %579 = vmatprep.subr.bf16.mxu0 0
      %580 = vmatpush1.bf16.msra.mxu0 0
      %581 = vmatprep.subr.bf16.mxu0 0
      %582 = vmatpush1.bf16.msra.mxu0 0
      %583 = vmatprep.mubr.bf16.mxu0 0
      %584 = vmatmul.mubr.bf16.gmra.mrb[0].mxu0 %v442
      %v585 = vpop.f32.mrb[0].mxu0
      %v586 = vadd.f32 %v464, %v585
      %v587 = vpop.f32.mrb[0].mxu0
      %v588 = vadd.f32 %v468, %v587
      %v589 = vpop.f32.mrb[0].mxu0
      %v590 = vpop.f32.mrb[0].mxu0
      %591 = vdwg.mxu0
      %vm592 = vcmp.gt.f32.partialorder %v586, 0.0
      %vm593 = vcmp.gt.f32.partialorder %v588, 0.0
      %v594 = vmul.f32 %v586, 0.01
      %v595 = vmul.f32 %v588, 0.01
      %v596 = vsel %vm592, %v586, %v594
      %v597 = vsel %vm593, %v588, %v595
      %v598 = vld [vmem:[#allocation9] sm:$0xff]
      %v599 = vld [vmem:[#allocation9 + $0x8] sm:$0xff]
      %v600 = vld [vmem:[#allocation9 + $0x10] sm:$0xff]
      %v601 = vld [vmem:[#allocation9 + $0x18] sm:$0xff]
      %v602 = vld [vmem:[#allocation9 + $0x20] sm:$0xff]
      %v603 = vld [vmem:[#allocation9 + $0x28] sm:$0xff]
      %v604 = vld [vmem:[#allocation9 + $0x30] sm:$0xff]
      %v605 = vld [vmem:[#allocation9 + $0x38] sm:$0xff]
      %v606 = vld [vmem:[#allocation9 + $0x40] sm:$0xff]
      %v607 = vld [vmem:[#allocation9 + $0x48] sm:$0xff]
      %v608 = vld [vmem:[#allocation9 + $0x50] sm:$0xff]
      %v609 = vld [vmem:[#allocation9 + $0x58] sm:$0xff]
      %v610 = vld [vmem:[#allocation9 + $0x60] sm:$0xff]
      %v611 = vld [vmem:[#allocation9 + $0x68] sm:$0xff]
      %v612 = vld [vmem:[#allocation9 + $0x70] sm:$0xff]
      %v613 = vld [vmem:[#allocation9 + $0x78] sm:$0xff]
      %v614 = vld [vmem:[#allocation9 + $0x80] sm:$0xff]
      %v615 = vld [vmem:[#allocation9 + $0x88] sm:$0xff]
      %v616 = vld [vmem:[#allocation9 + $0x90] sm:$0xff]
      %v617 = vld [vmem:[#allocation9 + $0x98] sm:$0xff]
      %v618 = vld [vmem:[#allocation9 + $0xa0] sm:$0xff]
      %v619 = vld [vmem:[#allocation9 + $0xa8] sm:$0xff]
      %v620 = vld [vmem:[#allocation9 + $0xb0] sm:$0xff]
      %v621 = vld [vmem:[#allocation9 + $0xb8] sm:$0xff]
      %v622 = vld [vmem:[#allocation9 + $0xc0] sm:$0xff]
      %v623 = vld [vmem:[#allocation9 + $0xc8] sm:$0xff]
      %v624 = vld [vmem:[#allocation9 + $0xd0] sm:$0xff]
      %v625 = vld [vmem:[#allocation9 + $0xd8] sm:$0xff]
      %v626 = vld [vmem:[#allocation9 + $0xe0] sm:$0xff]
      %v627 = vld [vmem:[#allocation9 + $0xe8] sm:$0xff]
      %v628 = vld [vmem:[#allocation9 + $0xf0] sm:$0xff]
      %v629 = vld [vmem:[#allocation9 + $0xf8] sm:$0xff]
      %v630 = vld [vmem:[%s5] sm:$0x1]
      %v632 = vlaneseq
      %v633 = vshrl.u32 %v632, 7
      %v634 = vsub.s32 0, %v633
      %v635 = vrot.slane %v630, %v634
      %637 = vmatprep.subr.mxu0 0.0
      %638 = vmatpush1.msra.mxu0 %v598
      %639 = vmatprep.subr.mxu0 0.0
      %640 = vmatpush1.msra.mxu0 %v599
      %641 = vmatprep.subr.mxu0 0.0
      %642 = vmatpush1.msra.mxu0 %v600
      %643 = vmatprep.subr.mxu0 0.0
      %644 = vmatpush1.msra.mxu0 %v601
      %645 = vmatprep.subr.mxu0 0.0
      %646 = vmatpush1.msra.mxu0 %v602
      %647 = vmatprep.subr.mxu0 0.0
      %648 = vmatpush1.msra.mxu0 %v603
      %649 = vmatprep.subr.mxu0 0.0
      %650 = vmatpush1.msra.mxu0 %v604
      %651 = vmatprep.subr.mxu0 0.0
      %652 = vmatpush1.msra.mxu0 %v605
      %653 = vmatprep.subr.mxu0 0.0
      %654 = vmatpush1.msra.mxu0 %v606
      %655 = vmatprep.subr.mxu0 0.0
      %656 = vmatpush1.msra.mxu0 %v607
      %657 = vmatprep.subr.mxu0 0.0
      %658 = vmatpush1.msra.mxu0 %v608
      %659 = vmatprep.subr.mxu0 0.0
      %660 = vmatpush1.msra.mxu0 %v609
      %661 = vmatprep.subr.mxu0 0.0
      %662 = vmatpush1.msra.mxu0 %v610
      %663 = vmatprep.subr.mxu0 0.0
      %664 = vmatpush1.msra.mxu0 %v611
      %665 = vmatprep.subr.mxu0 0.0
      %666 = vmatpush1.msra.mxu0 %v612
      %667 = vmatprep.subr.mxu0 0.0
      %668 = vmatpush1.msra.mxu0 %v613
      %669 = vmatprep.subr.mxu0 0.0
      %670 = vmatpush1.msra.mxu0 %v614
      %671 = vmatprep.subr.mxu0 0.0
      %672 = vmatpush1.msra.mxu0 %v615
      %673 = vmatprep.subr.mxu0 0.0
      %674 = vmatpush1.msra.mxu0 %v616
      %675 = vmatprep.subr.mxu0 0.0
      %676 = vmatpush1.msra.mxu0 %v617
      %677 = vmatprep.subr.mxu0 0.0
      %678 = vmatpush1.msra.mxu0 %v618
      %679 = vmatprep.subr.mxu0 0.0
      %680 = vmatpush1.msra.mxu0 %v619
      %681 = vmatprep.subr.mxu0 0.0
      %682 = vmatpush1.msra.mxu0 %v620
      %683 = vmatprep.subr.mxu0 0.0
      %684 = vmatpush1.msra.mxu0 %v621
      %685 = vmatprep.subr.mxu0 0.0
      %686 = vmatpush1.msra.mxu0 %v622
      %687 = vmatprep.subr.mxu0 0.0
      %688 = vmatpush1.msra.mxu0 %v623
      %689 = vmatprep.subr.mxu0 0.0
      %690 = vmatpush1.msra.mxu0 %v624
      %691 = vmatprep.subr.mxu0 0.0
      %692 = vmatpush1.msra.mxu0 %v625
      %693 = vmatprep.subr.mxu0 0.0
      %694 = vmatpush1.msra.mxu0 %v626
      %695 = vmatprep.subr.mxu0 0.0
      %696 = vmatpush1.msra.mxu0 %v627
      %697 = vmatprep.subr.mxu0 0.0
      %698 = vmatpush1.msra.mxu0 %v628
      %699 = vmatprep.subr.mxu0 0.0
      %700 = vmatpush1.msra.mxu0 %v629
      %701 = vmatprep.mubr.f32.mxu0 %v597
      %702 = vmatmul.mubr.f32.gmra.mrb[0].mxu0 %v596
      %v703 = vpop.f32.mrb[0].mxu0
      %v704 = vadd.f32 %v635, %v703
      %v705 = vpop.f32.mrb[0].mxu0
      %706 = vdwg.mxu0
      %707 = vst [vmem:[#allocation11] sm:$0xff] %v704
    $region49: #{tpu_custom_call.1} parent=1 // pred_fallthru
      _
    // Predicated region
    $region50: #{tpu_custom_call.1} parent=1 // pred_check
      _
    $region51: #{tpu_custom_call.1} parent=1 // pred_check_branch
      %709 = sbr.rel (0) target = $region53
    $region52: #{tpu_custom_call.1} parent=1 // pred_region
      %s711 = ssub.s32 128, 128
      %712 = vsyncadd [#allocation5], %s711
      %s714 = sshll.u32 [#allocation11], 4
      %s715 = int_to_ptr.vmem [resolvable:$true] %s714
      %717 = dma.vmem_to_hbm [thread:$0]  %s715, 128, %s6, [#allocation5]
    $region53: #{tpu_custom_call.1} parent=1 // pred_fallthru
      _
    // Predicated region
    $region54: #{tpu_custom_call.1} parent=1 // pred_check
      _
    $region55: #{tpu_custom_call.1} parent=1 // pred_check_branch
      %719 = sbr.rel (0) target = $region57
    $region56: #{tpu_custom_call.1} parent=1 // pred_region
      %720 = dma.done [#allocation5], 128
    $region57: #{tpu_custom_call.1} parent=1 // pred_fallthru
      _
    %721 = vsyncpa [#allocation4], 1
    %722 = vsyncpa [#allocation7], 1
    %723 = vsyncpa [#allocation10], 1
    %724 = vsyncpa [#allocation5], 1

</llo_original>
